<compile_context>
chip_gen: v7x
topology: tpu7x:2x2x1
jax: 0.10.0
libtpu: 0.0.40
codegen_flags: <defaults>
</compile_context>

<pallas_src>
import math
import numpy as np
import jax
import jax.numpy as jnp
from jax.experimental import pallas as pl
from jax.experimental.pallas import tpu as pltpu

_HALF_LOG_2PI = 0.5 * math.log(2.0 * math.pi)
_MIB = 1024 * 1024


def _homo_gaussian_kernel(mu_ref, x_ref, coeff_ref, const_ref, o_ref):
    # Elementwise: out = coeff * (x - mu)^2 + const
    #   coeff = -1 / (2 sigma^2), const = -log(sigma) - 0.5*log(2*pi)  (per lane)
    mu = mu_ref[...].astype(jnp.float32)
    x = x_ref[...].astype(jnp.float32)
    d = x - mu
    out = d * d * coeff_ref[...] + const_ref[...]   # (tile_rows, W) * (1, W) broadcast
    o_ref[...] = out.astype(o_ref.dtype)


def _vmem_capacity_bytes():
    try:
        return int(pltpu.get_tpu_info().vmem_capacity_bytes)
    except Exception:
        return 128 * _MIB   # assume v5e/v6e-class if the query is unavailable


def _chip_tuning():
    """Returns (target_bytes per operand block, vmem_limit_bytes)."""
    vmem_cap = _vmem_capacity_bytes()
    if vmem_cap <= 64 * _MIB:
        # v7x-class: 64 MiB VMEM, ~3.2 TB/s HBM. Bigger blocks amortize the
        # ~0.35us/step overhead; 3 arrays x 2 buffers x 6 MiB = 36 MiB < 44 MiB.
        return 6 * _MIB, 44 * _MIB
    # v5e / v6e (128 MiB physical): 2 MiB blocks -> 12 MiB in flight; 28 MiB
    # limit explicitly raises v5e's 16 MiB scoped default with ample headroom.
    return 2 * _MIB, 28 * _MIB


def _sublane_pack(itemsize):
    # f32 -> 8, bf16 -> 16, int8/fp8 -> 32 rows per packed sublane tile.
    return max(8, 32 // max(1, int(itemsize)))


def _choose_packed_width(rows, dim, max_lanes=4096, target_lanes=2048):
    """Lane-dense width W: multiple of 128 and of dim that divides rows*dim.
    Returns None if no such width exists (caller falls back to W = dim)."""
    if dim % 128 == 0:
        return dim                      # already lane-dense, no repack needed
    base = dim * (128 // math.gcd(dim, 128))   # lcm(dim, 128)
    n = rows * dim
    if base > max_lanes or n % base != 0:
        return None
    for k in range(max(1, target_lanes // base), 0, -1):
        if n % (base * k) == 0:
            return base * k
    return base


def _choose_tile_rows(rows_p, width, itemsize, target_bytes):
    pack = _sublane_pack(itemsize)
    if rows_p <= pack:
        return rows_p                   # single full-height block (== full dim)
    padded_w = -(-width // 128) * 128   # lane-padded width actually held in VMEM
    tr = (target_bytes // max(1, padded_w * itemsize)) // pack * pack
    tr = max(pack, int(tr))
    # Keep >= 2 grid steps so v7x can shard the parallel axis across its 2 TCs.
    half = ((rows_p + 1) // 2 + pack - 1) // pack * pack
    tr = min(tr, max(pack, half))
    return int(tr)


def homo_gaussian_log_prob(mu, x, log_sigma, *, min_sigma=1e-3,
                           tile_rows=None, out_dtype=None):
    """Normal(mu, clamp(exp(log_sigma), min_sigma)).log_prob(x), elementwise.

    `log_sigma` has shape (dim,) and broadcasts along the last axis of mu / x.
    `out_dtype` defaults to result_type(mu, x); pass jnp.float32 to keep full
    precision with low-precision inputs. Compute is always f32.
    """
    assert mu.shape == x.shape, "mu and x must have the same shape"
    dim = int(log_sigma.shape[-1])
    assert mu.shape[-1] == dim, "log_sigma must broadcast along the last axis"

    orig_shape = mu.shape
    if out_dtype is None:
        out_dtype = jnp.result_type(mu.dtype, x.dtype)

    rows = int(np.prod(orig_shape[:-1])) if len(orig_shape) > 1 else 1
    n_elems = rows * dim

    # Tiny per-dim precompute (dim elements) -- negligible next to the big tensors.
    sigma = jnp.maximum(jnp.exp(log_sigma.astype(jnp.float32)), jnp.float32(min_sigma))
    coeff_d = -0.5 / (sigma * sigma)
    const_d = -jnp.log(sigma) - _HALF_LOG_2PI

    # Lane-dense view: (rows, dim) -> (rows_p, W) when a suitable W exists.
    W = _choose_packed_width(rows, dim)
    if W is None:
        W = dim                          # narrow fallback (lanes padded to 128 in VMEM)
    rows_p = n_elems // W
    mu2 = mu.reshape(rows_p, W)          # contiguous reshape: no extra HBM pass
    x2 = x.reshape(rows_p, W)
    reps = W // dim
    coeff = jnp.tile(coeff_d, reps).reshape(1, W)
    const = jnp.tile(const_d, reps).reshape(1, W)

    itemsize = int(jnp.dtype(mu.dtype).itemsize)
    target_bytes, vmem_limit = _chip_tuning()
    if tile_rows is None:
        tile_rows = _choose_tile_rows(rows_p, W, itemsize, target_bytes)
    tile_rows = int(min(tile_rows, rows_p)) if rows_p > 0 else 1

    grid = (pl.cdiv(rows_p, tile_rows),)

    cost = pl.CostEstimate(
        flops=4 * n_elems,               # sub, mul, mul, add per element
        transcendentals=0,
        bytes_accessed=n_elems * (2 * itemsize + int(jnp.dtype(out_dtype).itemsize)),
    )

    out2 = pl.pallas_call(
        _homo_gaussian_kernel,
        out_shape=jax.ShapeDtypeStruct((rows_p, W), out_dtype),
        grid_spec=pltpu.PrefetchScalarGridSpec(
            num_scalar_prefetch=0,
            grid=grid,
            in_specs=[
                pl.BlockSpec((tile_rows, W), lambda i: (i, 0)),
                pl.BlockSpec((tile_rows, W), lambda i: (i, 0)),
                pl.BlockSpec((1, W), lambda i: (0, 0)),   # coeff (tiny, reused)
                pl.BlockSpec((1, W), lambda i: (0, 0)),   # const (tiny, reused)
            ],
            out_specs=pl.BlockSpec((tile_rows, W), lambda i: (i, 0)),
        ),
        compiler_params=pltpu.CompilerParams(
            dimension_semantics=("parallel",),   # v7x shards grid steps across 2 TCs
            vmem_limit_bytes=int(vmem_limit),
        ),
        cost_estimate=cost,
    )(mu2, x2, coeff, const)

    return out2.reshape(orig_shape)


def _reference(mu, x, log_sigma, min_sigma=1e-3):
    # Pure-JAX reference: Normal(mu, clamp(exp(log_sigma), min_sigma)).log_prob(x)
    sigma = jnp.maximum(jnp.exp(log_sigma.astype(jnp.float32)), min_sigma)
    mu = mu.astype(jnp.float32)
    x = x.astype(jnp.float32)
    return -0.5 * jnp.square((x - mu) / sigma) - jnp.log(sigma) - _HALF_LOG_2PI


if __name__ == "__main__":
    key = jax.random.PRNGKey(0)
    k1, k2, k3, k4, k5, k6, k7 = jax.random.split(key, 7)

    # batch=2, seq=8, hidden=32: HomoGaussian over the last (dim) axis.
    # dim=32 < 128 -> lane-dense repack path (W = 512 here).
    dim = 32
    mu = jax.random.normal(k1, (2, 8, dim), dtype=jnp.float32)
    x = jax.random.normal(k2, (2, 8, dim), dtype=jnp.float32)
    log_sigma = 0.1 * jax.random.normal(k3, (dim,), dtype=jnp.float32)

    out = jax.block_until_ready(homo_gaussian_log_prob(mu, x, log_sigma))
    ref = _reference(mu, x, log_sigma)
    assert out.shape == mu.shape
    assert jnp.allclose(out, ref, atol=1e-5, rtol=1e-5), "mismatch vs reference"

    # Non-repackable element count (rows=15, dim=32): falls back to the narrow
    # (rows, dim) path; grid = cdiv masks the ragged last block.
    mu_r = jax.random.normal(k4, (3, 5, dim), dtype=jnp.float32)
    x_r = jax.random.normal(k5, (3, 5, dim), dtype=jnp.float32)
    out_r = jax.block_until_ready(
        homo_gaussian_log_prob(mu_r, x_r, log_sigma, tile_rows=8))
    ref_r = _reference(mu_r, x_r, log_sigma)
    assert jnp.allclose(out_r, ref_r, atol=1e-5, rtol=1e-5), "mismatch (ragged) vs reference"

    # bf16 inputs with dim already a multiple of 128 (no repack needed),
    # f32 output requested via the out_dtype knob; exercises bf16 sublane packing.
    dim2 = 128
    mu_b = jax.random.normal(k6, (4, 16, dim2), dtype=jnp.bfloat16)
    x_b = jax.random.normal(k7, (4, 16, dim2), dtype=jnp.bfloat16)
    log_sigma2 = jnp.zeros((dim2,), dtype=jnp.float32)
    out_b = jax.block_until_ready(
        homo_gaussian_log_prob(mu_b, x_b, log_sigma2, out_dtype=jnp.float32))
    ref_b = _reference(mu_b, x_b, log_sigma2)
    assert out_b.dtype == jnp.float32
    assert jnp.allclose(out_b, ref_b, atol=1e-5, rtol=1e-5), "mismatch (bf16) vs reference"

    print("KERNEL_OK")
</pallas_src>

<mosaic_0001>
module attributes {stable_mosaic.version = 11 : i64} {
  func.func @_homo_gaussian_kernel(%arg0: i32, %arg1: memref<1x512xf32, #tpu.memory_space<vmem>>, %arg2: memref<1x512xf32, #tpu.memory_space<vmem>>, %arg3: memref<1x512xf32, #tpu.memory_space<vmem>>, %arg4: memref<1x512xf32, #tpu.memory_space<vmem>>, %arg5: memref<1x512xf32, #tpu.memory_space<vmem>>) attributes {dimension_semantics = [#tpu.dimension_semantics<parallel>], iteration_bounds = array<i64: 1>, scalar_prefetch = 0 : i64, scratch_operands = 0 : i64, tpu.core_type = #tpu.core_type<tc>, window_params = [{transform_indices = @transform_0, window_bounds = array<i64: 1, 512>}, {transform_indices = @transform_1, window_bounds = array<i64: 1, 512>}, {pipeline_mode = #tpu.pipeline_mode<synchronous>, transform_indices = @transform_2, window_bounds = array<i64: 1, 512>}, {pipeline_mode = #tpu.pipeline_mode<synchronous>, transform_indices = @transform_3, window_bounds = array<i64: 1, 512>}, {transform_indices = @transform_4, window_bounds = array<i64: 1, 512>}]} {
    %c0 = arith.constant 0 : index
    %c0_0 = arith.constant 0 : index
    %0 = vector.load %arg1[%c0, %c0_0] : memref<1x512xf32, #tpu.memory_space<vmem>>, vector<1x512xf32>
    %c0_1 = arith.constant 0 : index
    %c0_2 = arith.constant 0 : index
    %1 = vector.load %arg2[%c0_1, %c0_2] : memref<1x512xf32, #tpu.memory_space<vmem>>, vector<1x512xf32>
    %2 = arith.subf %1, %0 : vector<1x512xf32>
    %3 = arith.mulf %2, %2 : vector<1x512xf32>
    %c0_3 = arith.constant 0 : index
    %c0_4 = arith.constant 0 : index
    %4 = vector.load %arg3[%c0_3, %c0_4] : memref<1x512xf32, #tpu.memory_space<vmem>>, vector<1x512xf32>
    %5 = arith.mulf %3, %4 : vector<1x512xf32>
    %c0_5 = arith.constant 0 : index
    %c0_6 = arith.constant 0 : index
    %6 = vector.load %arg4[%c0_5, %c0_6] : memref<1x512xf32, #tpu.memory_space<vmem>>, vector<1x512xf32>
    %7 = arith.addf %5, %6 : vector<1x512xf32>
    %c0_7 = arith.constant 0 : index
    %c0_8 = arith.constant 0 : index
    %8 = vector.load %arg5[%c0_7, %c0_8] : memref<1x512xf32, #tpu.memory_space<vmem>>, vector<1x512xf32>
    tpu.vector_store %arg5[%c0_7, %c0_8], %7 {strides = array<i32>} : memref<1x512xf32, #tpu.memory_space<vmem>>, vector<1x512xf32>,
    return
  }
  func.func @transform_0(%arg0: i32) -> (i32, i32) {
    %c0_i32 = arith.constant 0 : i32
    %c0_i32_0 = arith.constant 0 : i32
    return %arg0, %c0_i32 : i32, i32
  }
  func.func @transform_1(%arg0: i32) -> (i32, i32) {
    %c0_i32 = arith.constant 0 : i32
    %c0_i32_0 = arith.constant 0 : i32
    return %arg0, %c0_i32 : i32, i32
  }
  func.func @transform_2(%arg0: i32) -> (i32, i32) {
    %c0_i32 = arith.constant 0 : i32
    %c0_i32_0 = arith.constant 0 : i32
    %c0_i32_1 = arith.constant 0 : i32
    return %c0_i32, %c0_i32_0 : i32, i32
  }
  func.func @transform_3(%arg0: i32) -> (i32, i32) {
    %c0_i32 = arith.constant 0 : i32
    %c0_i32_0 = arith.constant 0 : i32
    %c0_i32_1 = arith.constant 0 : i32
    return %c0_i32, %c0_i32_0 : i32, i32
  }
  func.func @transform_4(%arg0: i32) -> (i32, i32) {
    %c0_i32 = arith.constant 0 : i32
    %c0_i32_0 = arith.constant 0 : i32
    return %arg0, %c0_i32 : i32, i32
  }
}

</mosaic_0001>

<llo_original>
// kernel: tpu_custom_call.1
$region0: #{tpu_custom_call.1}
  #allocation0 [shape = 'u32[]', space=smem, size = 0x4, offset = 0x4, fixed_abs, tag = 'smem constant byte address 0x4 - core index']
  #allocation1 [shape = 'u32[144,128]{1,0:T(1,128)}', space=vmem, size = 0x12000, scoped, tag = 'internal scratch']
  %s0 = inlined_call_operand.hbm [shape: f32[1,512], index: 0, kind: input, shape index: {}]
  %s1 = inlined_call_operand.hbm [shape: f32[1,512], index: 1, kind: input, shape index: {}]
  %s2 = inlined_call_operand.vmem [shape: f32[1,512], index: 2, kind: input, shape index: {}]
  %s3 = inlined_call_operand.vmem [shape: f32[1,512], index: 3, kind: input, shape index: {}]
  %s4 = inlined_call_operand.hbm [shape: f32[1,512], index: 4, kind: output, shape index: {}]
  %s5 = sld [smem:[#allocation0]]
  $region34: #{tpu_custom_call.1} parent=0
    _
  %s7 = ssub.s32 1, %s5
  %s8 = scalar_select 0, %s7, %s5
  $region1: #{tpu_custom_call.1} parent=0
    #allocation2 [shape = 'u8[2048]{0}', space=vmem, size = 0x800, scoped, tag = 'input window, operand 0, single buffered']
    #allocation3 [shape = 's32[1]{0}', space=sflag, size = 0x4, scoped, tag = 'scoped memory for tpu_custom_call.1']
    #allocation4 [shape = 's32[1]{0}', space=sflag, size = 0x4, scoped, tag = 'scoped memory for tpu_custom_call.1']
    #allocation5 [shape = 'u8[2048]{0}', space=vmem, size = 0x800, scoped, tag = 'input window, operand 1, single buffered']
    #allocation6 [shape = 's32[1]{0}', space=sflag, size = 0x4, scoped, tag = 'scoped memory for tpu_custom_call.1']
    #allocation7 [shape = 'u8[2048]{0}', space=vmem, size = 0x800, scoped, tag = 'output window, operand 0, single buffered']
    %9 = vsyncpa [#allocation3], 0
    %10 = vsyncpa [#allocation6], 0
    %11 = vsyncpa [#allocation4], 0
    // Predicated region
    $region2: #{tpu_custom_call.1} parent=1 // pred_check
      _
    $region3: #{tpu_custom_call.1} parent=1 // pred_check_branch
      %13 = sbr.rel (0) target = $region5
    $region4: #{tpu_custom_call.1} parent=1 // pred_region
      %s15 = ssub.s32 64, 64
      %16 = vsyncadd [#allocation3], %s15
      %s18 = sshll.u32 [#allocation2], 4
      %s19 = int_to_ptr.vmem [resolvable:$true] %s18
      %21 = dma.hbm_to_vmem [thread:$0]  %s0, 64, %s19, [#allocation3]
    $region5: #{tpu_custom_call.1} parent=1 // pred_fallthru
      _
    // Predicated region
    $region6: #{tpu_custom_call.1} parent=1 // pred_check
      _
    $region7: #{tpu_custom_call.1} parent=1 // pred_check_branch
      %23 = sbr.rel (0) target = $region9
    $region8: #{tpu_custom_call.1} parent=1 // pred_region
      %s25 = ssub.s32 64, 64
      %26 = vsyncadd [#allocation6], %s25
      %s28 = sshll.u32 [#allocation5], 4
      %s29 = int_to_ptr.vmem [resolvable:$true] %s28
      %31 = dma.hbm_to_vmem [thread:$0]  %s1, 64, %s29, [#allocation6]
    $region9: #{tpu_custom_call.1} parent=1 // pred_fallthru
      _
    // Predicated region
    $region10: #{tpu_custom_call.1} parent=1 // pred_check
      _
    $region11: #{tpu_custom_call.1} parent=1 // pred_check_branch
      %33 = sbr.rel (0) target = $region13
    $region12: #{tpu_custom_call.1} parent=1 // pred_region
      _
    $region13: #{tpu_custom_call.1} parent=1 // pred_fallthru
      _
    // Predicated region
    $region14: #{tpu_custom_call.1} parent=1 // pred_check
      _
    $region15: #{tpu_custom_call.1} parent=1 // pred_check_branch
      %35 = sbr.rel (0) target = $region17
    $region16: #{tpu_custom_call.1} parent=1 // pred_region
      _
    $region17: #{tpu_custom_call.1} parent=1 // pred_fallthru
      _
    // Predicated region
    $region18: #{tpu_custom_call.1} parent=1 // pred_check
      _
    $region19: #{tpu_custom_call.1} parent=1 // pred_check_branch
      %37 = sbr.rel (0) target = $region21
    $region20: #{tpu_custom_call.1} parent=1 // pred_region
      %38 = dma.done [#allocation3], 64
    $region21: #{tpu_custom_call.1} parent=1 // pred_fallthru
      _
    // Predicated region
    $region22: #{tpu_custom_call.1} parent=1 // pred_check
      _
    $region23: #{tpu_custom_call.1} parent=1 // pred_check_branch
      %40 = sbr.rel (0) target = $region25
    $region24: #{tpu_custom_call.1} parent=1 // pred_region
      %41 = dma.done [#allocation6], 64
    $region25: #{tpu_custom_call.1} parent=1 // pred_fallthru
      _
    %v42 = vld [vmem:[#allocation2] sm:$0xf]
    %v43 = vld [vmem:[#allocation5] sm:$0xf]
    %v44 = vsub.f32 %v43, %v42
    %v45 = vmul.f32 %v44, %v44
    %v46 = vld [vmem:[%s2] sm:$0xf]
    %v47 = vmul.f32 %v45, %v46
    %v48 = vld [vmem:[%s3] sm:$0xf]
    %v49 = vadd.f32 %v47, %v48
    %v50 = vlaneseq
    %vm51 = vcmp.ge.s32.totalorder %v50, 0
    %vm52 = vcmp.lt.s32.totalorder %v50, 512
    %vm53 = vmand %vm51, %vm52
    %54 = vst.msk [vmem:[#allocation7] sm:$0xf] %vm53, %v49
    // Predicated region
    $region26: #{tpu_custom_call.1} parent=1 // pred_check
      _
    $region27: #{tpu_custom_call.1} parent=1 // pred_check_branch
      %56 = sbr.rel (0) target = $region29
    $region28: #{tpu_custom_call.1} parent=1 // pred_region
      %s58 = ssub.s32 64, 64
      %59 = vsyncadd [#allocation4], %s58
      %s61 = sshll.u32 [#allocation7], 4
      %s62 = int_to_ptr.vmem [resolvable:$true] %s61
      %64 = dma.vmem_to_hbm [thread:$0]  %s62, 64, %s4, [#allocation4]
    $region29: #{tpu_custom_call.1} parent=1 // pred_fallthru
      _
    // Predicated region
    $region30: #{tpu_custom_call.1} parent=1 // pred_check
      _
    $region31: #{tpu_custom_call.1} parent=1 // pred_check_branch
      %66 = sbr.rel (0) target = $region33
    $region32: #{tpu_custom_call.1} parent=1 // pred_region
      %67 = dma.done [#allocation4], 64
    $region33: #{tpu_custom_call.1} parent=1 // pred_fallthru
      _
    %68 = vsyncpa [#allocation3], 1
    %69 = vsyncpa [#allocation6], 1
    %70 = vsyncpa [#allocation4], 1

</llo_original>
